<compile_context>
chip_gen: v5e
topology: v5e:2x2
jax: 0.10.0
libtpu: 0.0.40
codegen_flags: <defaults>
</compile_context>

<pallas_src>
import math
import functools

import jax
import jax.numpy as jnp
from jax.experimental import pallas as pl
from jax.experimental.pallas import tpu as pltpu


def _round_up(x, m):
    return ((x + m - 1) // m) * m


# ----------------------------------------------------------------------------
# Kernel
# ----------------------------------------------------------------------------
def _make_siamese_kernel(num_shared: int):
    """Fused MLP kernel; each grid step processes one batch tile of BOTH branches."""

    def kernel(x1_ref, x2_ref, w_in_ref, b_in_ref, w_sh_ref, b_sh_ref,
               w_out_ref, b_out_ref, o1_ref, o2_ref):
        def branch(x_ref, o_ref):
            # input_emb: Linear + (Dropout=identity) + ReLU
            h = jnp.dot(x_ref[...].astype(jnp.bfloat16), w_in_ref[...],
                        preferred_element_type=jnp.float32)
            h = jnp.maximum(h + b_in_ref[...], 0.0)                 # (T, Hp) f32

            # hidden_layers_shared: num_shared x (Linear + Dropout + ReLU)
            for l in range(num_shared):                              # static unroll
                h = jnp.dot(h.astype(jnp.bfloat16), w_sh_ref[l],
                            preferred_element_type=jnp.float32)
                h = jnp.maximum(h + b_sh_ref[l], 0.0)                # (T, Hp) f32

            # Fused output heads: [output_layer_spk | output_layer_phn]
            out = jnp.dot(h.astype(jnp.bfloat16), w_out_ref[...],
                          preferred_element_type=jnp.float32)
            o_ref[...] = jnp.maximum(out + b_out_ref[...], 0.0)      # (T, Out2p)

        branch(x1_ref, o1_ref)
        branch(x2_ref, o2_ref)

    return kernel


def _vmem_limit_bytes(tile, d_in, hp, out2p, num_shared):
    bf16, f32 = 2, 4
    ns = max(num_shared, 1)
    weights = d_in * hp * bf16 + ns * hp * hp * bf16 + hp * out2p * bf16
    biases = hp * f32 + ns * hp * f32 + out2p * f32
    per_step_io = 2 * tile * d_in * f32 + 2 * tile * out2p * f32      # x1,x2,o1,o2
    activations = 8 * tile * hp * f32                                  # live h (+bf16 copies)
    need = weights + biases + 2 * per_step_io + activations + (4 << 20)
    # Floor at 32 MiB (within v7x's 64 MiB physical VMEM; also fine on v5e/v6e).
    return int(max(need, 32 << 20))


# ----------------------------------------------------------------------------
# Wrapper
# ----------------------------------------------------------------------------
def siamese_multitask_forward(x1, x2, packed, *, num_shared, d_out,
                              batch_tile=256):
    """Runs forward(input1, input2); returns (spk1, phn1, spk2, phn2)."""
    B, D_in = x1.shape
    Hp = packed["w_in"].shape[1]
    Out2p = packed["w_out"].shape[1]
    ns = max(num_shared, 1)

    # Batch tile: multiple of 8; 256 rows per branch per step at production sizes
    # (MXU-height multiple on v6e/v7x).  Pad B (rows only, zeros) to a tile multiple.
    tile = _round_up(B, 8) if B <= batch_tile else batch_tile
    Bp = _round_up(B, tile)
    if Bp != B:
        x1 = jnp.pad(x1, ((0, Bp - B), (0, 0)))
        x2 = jnp.pad(x2, ((0, Bp - B), (0, 0)))
    num_tiles = Bp // tile

    kernel = _make_siamese_kernel(num_shared)

    x_spec = pl.BlockSpec((tile, D_in), lambda i: (i, 0))
    o_spec = pl.BlockSpec((tile, Out2p), lambda i: (i, 0))
    # Weights / biases: full-array blocks with a constant index_map -> resident,
    # not re-DMA'd across grid steps.
    w_in_spec = pl.BlockSpec((D_in, Hp), lambda i: (0, 0))
    b_in_spec = pl.BlockSpec((1, Hp), lambda i: (0, 0))
    w_sh_spec = pl.BlockSpec((ns, Hp, Hp), lambda i: (0, 0, 0))
    b_sh_spec = pl.BlockSpec((ns, 1, Hp), lambda i: (0, 0, 0))
    w_out_spec = pl.BlockSpec((Hp, Out2p), lambda i: (0, 0))
    b_out_spec = pl.BlockSpec((1, Out2p), lambda i: (0, 0))

    out1, out2 = pl.pallas_call(
        kernel,
        out_shape=(jax.ShapeDtypeStruct((Bp, Out2p), jnp.float32),
                   jax.ShapeDtypeStruct((Bp, Out2p), jnp.float32)),
        grid=(num_tiles,),
        in_specs=[x_spec, x_spec, w_in_spec, b_in_spec, w_sh_spec, b_sh_spec,
                  w_out_spec, b_out_spec],
        out_specs=[o_spec, o_spec],
        compiler_params=pltpu.CompilerParams(
            dimension_semantics=("parallel",),
            vmem_limit_bytes=_vmem_limit_bytes(tile, D_in, Hp, Out2p, num_shared)),
    )(x1, x2, packed["w_in"], packed["b_in"], packed["w_sh"], packed["b_sh"],
      packed["w_out"], packed["b_out"])

    # Strip batch padding, split fused heads in the wrapper.
    spk1 = out1[:B, :d_out]
    phn1 = out1[:B, d_out:2 * d_out]
    spk2 = out2[:B, :d_out]
    phn2 = out2[:B, d_out:2 * d_out]
    return spk1, phn1, spk2, phn2


# ----------------------------------------------------------------------------
# Parameters
# ----------------------------------------------------------------------------
def _xavier_uniform(key, fan_in, fan_out, gain):
    # nn.init.xavier_uniform with gain; stored as (fan_in, fan_out)
    # (transposed vs. PyTorch's (out, in) -- distribution is symmetric in fans).
    bound = gain * math.sqrt(6.0 / (fan_in + fan_out))
    return jax.random.uniform(key, (fan_in, fan_out), jnp.float32, -bound, bound)


def init_params(key, input_dim, hidden_dim, output_dim, num_shared):
    """PyTorch-faithful (unpadded, f32) parameters."""
    gain = math.sqrt(2.0)  # nn.init.calculate_gain('relu')
    keys = jax.random.split(key, 3 + num_shared)
    w_in = _xavier_uniform(keys[0], input_dim, hidden_dim, gain)
    b_in = jnp.zeros((hidden_dim,), jnp.float32)
    w_sh = [_xavier_uniform(keys[1 + l], hidden_dim, hidden_dim, gain)
            for l in range(num_shared)]
    b_sh = [jnp.zeros((hidden_dim,), jnp.float32) for _ in range(num_shared)]
    w_spk = _xavier_uniform(keys[1 + num_shared], hidden_dim, output_dim, gain)
    b_spk = jnp.zeros((output_dim,), jnp.float32)
    w_phn = _xavier_uniform(keys[2 + num_shared], hidden_dim, output_dim, gain)
    b_phn = jnp.zeros((output_dim,), jnp.float32)
    # TODO(synk): hidden_layers_spk / hidden_layers_phn weights exist in the
    # PyTorch module but are never used by forward_once, so they are not created.
    return dict(w_in=w_in, b_in=b_in, w_sh=w_sh, b_sh=b_sh,
                w_spk=w_spk, b_spk=b_spk, w_phn=w_phn, b_phn=b_phn)


def pack_params(params, num_shared):
    """Pad N dims to lane-dense (multiples of 128), fuse spk|phn heads, and cast
    matmul weights to bf16 (int8 weights would also work on v5e/v6e; v7x's MXU is
    fp8-only, so bf16 is the portable choice). Biases stay f32."""
    D_in, H = params["w_in"].shape
    D_out = params["w_spk"].shape[1]
    Hp = _round_up(H, 128)
    Out2p = _round_up(2 * D_out, 128)

    def pad2(w, rows, cols):
        return jnp.pad(w, ((0, rows - w.shape[0]), (0, cols - w.shape[1])))

    # D_in stays unpadded: the MXU handles K=40 (no 3.2x inflation of the x stream).
    w_in = pad2(params["w_in"], D_in, Hp).astype(jnp.bfloat16)
    b_in = jnp.pad(params["b_in"], (0, Hp - H)).reshape(1, Hp)

    if num_shared > 0:
        w_sh = jnp.stack([pad2(w, Hp, Hp) for w in params["w_sh"]], axis=0)
        b_sh = jnp.stack([jnp.pad(b, (0, Hp - H)).reshape(1, Hp)
                          for b in params["b_sh"]], axis=0)
    else:  # dummy (unused) operands so the kernel signature is stable
        w_sh = jnp.zeros((1, Hp, Hp), jnp.float32)
        b_sh = jnp.zeros((1, 1, Hp), jnp.float32)
    w_sh = w_sh.astype(jnp.bfloat16)

    w_out = pad2(jnp.concatenate([params["w_spk"], params["w_phn"]], axis=1),
                 Hp, Out2p).astype(jnp.bfloat16)
    b_out = jnp.pad(jnp.concatenate([params["b_spk"], params["b_phn"]]),
                    (0, Out2p - 2 * D_out)).reshape(1, Out2p)
    return dict(w_in=w_in, b_in=b_in, w_sh=w_sh, b_sh=b_sh,
                w_out=w_out, b_out=b_out)


# ----------------------------------------------------------------------------
# References (for the in-script sanity check)
# ----------------------------------------------------------------------------
def _reference_forward(x1, x2, params, num_shared, bf16_operands):
    """Pure-JAX reference of the same eval-mode forward."""
    def dot(a, w):
        if bf16_operands:
            return jnp.dot(a.astype(jnp.bfloat16), w.astype(jnp.bfloat16),
                           preferred_element_type=jnp.float32)
        return jnp.dot(a, w, preferred_element_type=jnp.float32)

    def once(x):
        h = jnp.maximum(dot(x, params["w_in"]) + params["b_in"], 0.0)
        for l in range(num_shared):
            h = jnp.maximum(dot(h, params["w_sh"][l]) + params["b_sh"][l], 0.0)
        spk = jnp.maximum(dot(h, params["w_spk"]) + params["b_spk"], 0.0)
        phn = jnp.maximum(dot(h, params["w_phn"]) + params["b_phn"], 0.0)
        return spk, phn

    s1, p1 = once(x1)
    s2, p2 = once(x2)
    return s1, p1, s2, p2


# ----------------------------------------------------------------------------
# Demo / self-check
# ----------------------------------------------------------------------------
if __name__ == "__main__":
    # Small, module-consistent shapes:
    #   input_dim=40 (speech features), hidden_dim=32, output_dim=16,
    #   num_hidden_layers_shared=2, batch=8, activation='relu'.
    B, INPUT_DIM, HIDDEN_DIM, OUTPUT_DIM = 8, 40, 32, 16
    NUM_SHARED = 2

    key = jax.random.PRNGKey(0)
    k_params, k_x1, k_x2 = jax.random.split(key, 3)
    params = init_params(k_params, INPUT_DIM, HIDDEN_DIM, OUTPUT_DIM, NUM_SHARED)
    packed = pack_params(params, NUM_SHARED)
    x1 = jax.random.normal(k_x1, (B, INPUT_DIM), jnp.float32)
    x2 = jax.random.normal(k_x2, (B, INPUT_DIM), jnp.float32)

    fwd = jax.jit(functools.partial(siamese_multitask_forward,
                                    num_shared=NUM_SHARED, d_out=OUTPUT_DIM))
    spk1, phn1, spk2, phn2 = fwd(x1, x2, packed)
    jax.block_until_ready((spk1, phn1, spk2, phn2))

    # Check vs. a bf16-operand reference (same arithmetic: bf16 products, f32 acc).
    ref_bf16 = _reference_forward(x1, x2, params, NUM_SHARED, bf16_operands=True)
    for got, want in zip((spk1, phn1, spk2, phn2), ref_bf16):
        assert got.shape == want.shape and got.dtype == jnp.float32
        assert jnp.allclose(got, want, atol=5e-3, rtol=5e-3)

    # Loose check vs. the full-f32 reference (bf16 operand rounding tolerance).
    ref_f32 = _reference_forward(x1, x2, params, NUM_SHARED, bf16_operands=False)
    for got, want in zip((spk1, phn1, spk2, phn2), ref_f32):
        assert jnp.allclose(got, want, atol=5e-2, rtol=5e-2)

    print("KERNEL_OK")
</pallas_src>

<mosaic_0001>
module attributes {stable_mosaic.version = 11 : i64} {
  func.func @kernel(%arg0: i32, %arg1: memref<8x40xf32, #tpu.memory_space<vmem>>, %arg2: memref<8x40xf32, #tpu.memory_space<vmem>>, %arg3: memref<40x128xbf16, #tpu.memory_space<vmem>>, %arg4: memref<1x128xf32, #tpu.memory_space<vmem>>, %arg5: memref<2x128x128xbf16, #tpu.memory_space<vmem>>, %arg6: memref<2x1x128xf32, #tpu.memory_space<vmem>>, %arg7: memref<128x128xbf16, #tpu.memory_space<vmem>>, %arg8: memref<1x128xf32, #tpu.memory_space<vmem>>, %arg9: memref<8x128xf32, #tpu.memory_space<vmem>>, %arg10: memref<8x128xf32, #tpu.memory_space<vmem>>) attributes {dimension_semantics = [#tpu.dimension_semantics<parallel>], iteration_bounds = array<i64: 1>, scalar_prefetch = 0 : i64, scratch_operands = 0 : i64, tpu.core_type = #tpu.core_type<tc>, window_params = [{transform_indices = @transform_0, window_bounds = array<i64: 8, 40>}, {transform_indices = @transform_1, window_bounds = array<i64: 8, 40>}, {pipeline_mode = #tpu.pipeline_mode<synchronous>, transform_indices = @transform_2, window_bounds = array<i64: 40, 128>}, {pipeline_mode = #tpu.pipeline_mode<synchronous>, transform_indices = @transform_3, window_bounds = array<i64: 1, 128>}, {pipeline_mode = #tpu.pipeline_mode<synchronous>, transform_indices = @transform_4, window_bounds = array<i64: 2, 128, 128>}, {pipeline_mode = #tpu.pipeline_mode<synchronous>, transform_indices = @transform_5, window_bounds = array<i64: 2, 1, 128>}, {pipeline_mode = #tpu.pipeline_mode<synchronous>, transform_indices = @transform_6, window_bounds = array<i64: 128, 128>}, {pipeline_mode = #tpu.pipeline_mode<synchronous>, transform_indices = @transform_7, window_bounds = array<i64: 1, 128>}, {transform_indices = @transform_8, window_bounds = array<i64: 8, 128>}, {transform_indices = @transform_9, window_bounds = array<i64: 8, 128>}]} {
    %c0 = arith.constant 0 : index
    %c0_0 = arith.constant 0 : index
    %0 = vector.load %arg1[%c0, %c0_0] : memref<8x40xf32, #tpu.memory_space<vmem>>, vector<8x40xf32>
    %1 = arith.truncf %0 : vector<8x40xf32> to vector<8x40xbf16>
    %c0_1 = arith.constant 0 : index
    %c0_2 = arith.constant 0 : index
    %2 = vector.load %arg3[%c0_1, %c0_2] : memref<40x128xbf16, #tpu.memory_space<vmem>>, vector<40x128xbf16>
    %cst = arith.constant dense<0.000000e+00> : vector<8x128xf32>
    %3 = tpu.matmul %1, %2, %cst {dimension_numbers = #tpu.dot_dimension_numbers<[1], [0], [0], [1], [0, 0, 1, 1], [], []>} : vector<8x40xbf16>, vector<40x128xbf16>, vector<8x128xf32> -> vector<8x128xf32>
    %c0_3 = arith.constant 0 : index
    %c0_4 = arith.constant 0 : index
    %4 = vector.load %arg4[%c0_3, %c0_4] : memref<1x128xf32, #tpu.memory_space<vmem>>, vector<1x128xf32>
    %5 = vector.broadcast %4 : vector<1x128xf32> to vector<8x128xf32>
    %6 = arith.addf %3, %5 : vector<8x128xf32>
    %cst_5 = arith.constant 0.000000e+00 : f32
    %7 = vector.broadcast %cst_5 : f32 to vector<8x128xf32>
    %8 = arith.maximumf %6, %7 : vector<8x128xf32>
    %9 = arith.truncf %8 : vector<8x128xf32> to vector<8x128xbf16>
    %c0_6 = arith.constant 0 : index
    %c0_7 = arith.constant 0 : index
    %c0_8 = arith.constant 0 : index
    %10 = vector.load %arg5[%c0_6, %c0_7, %c0_8] : memref<2x128x128xbf16, #tpu.memory_space<vmem>>, vector<1x128x128xbf16>
    %11 = vector.shape_cast %10 : vector<1x128x128xbf16> to vector<128x128xbf16>
    %cst_9 = arith.constant dense<0.000000e+00> : vector<8x128xf32>
    %12 = tpu.matmul %9, %11, %cst_9 {dimension_numbers = #tpu.dot_dimension_numbers<[1], [0], [0], [1], [0, 0, 1, 1], [], []>} : vector<8x128xbf16>, vector<128x128xbf16>, vector<8x128xf32> -> vector<8x128xf32>
    %c0_10 = arith.constant 0 : index
    %c0_11 = arith.constant 0 : index
    %c0_12 = arith.constant 0 : index
    %13 = vector.load %arg6[%c0_10, %c0_11, %c0_12] : memref<2x1x128xf32, #tpu.memory_space<vmem>>, vector<1x1x128xf32>
    %14 = vector.shape_cast %13 : vector<1x1x128xf32> to vector<1x128xf32>
    %15 = vector.broadcast %14 : vector<1x128xf32> to vector<8x128xf32>
    %16 = arith.addf %12, %15 : vector<8x128xf32>
    %cst_13 = arith.constant 0.000000e+00 : f32
    %17 = vector.broadcast %cst_13 : f32 to vector<8x128xf32>
    %18 = arith.maximumf %16, %17 : vector<8x128xf32>
    %19 = arith.truncf %18 : vector<8x128xf32> to vector<8x128xbf16>
    %c1 = arith.constant 1 : index
    %c0_14 = arith.constant 0 : index
    %c0_15 = arith.constant 0 : index
    %20 = vector.load %arg5[%c1, %c0_14, %c0_15] : memref<2x128x128xbf16, #tpu.memory_space<vmem>>, vector<1x128x128xbf16>
    %21 = vector.shape_cast %20 : vector<1x128x128xbf16> to vector<128x128xbf16>
    %cst_16 = arith.constant dense<0.000000e+00> : vector<8x128xf32>
    %22 = tpu.matmul %19, %21, %cst_16 {dimension_numbers = #tpu.dot_dimension_numbers<[1], [0], [0], [1], [0, 0, 1, 1], [], []>} : vector<8x128xbf16>, vector<128x128xbf16>, vector<8x128xf32> -> vector<8x128xf32>
    %c1_17 = arith.constant 1 : index
    %c0_18 = arith.constant 0 : index
    %c0_19 = arith.constant 0 : index
    %23 = vector.load %arg6[%c1_17, %c0_18, %c0_19] : memref<2x1x128xf32, #tpu.memory_space<vmem>>, vector<1x1x128xf32>
    %24 = vector.shape_cast %23 : vector<1x1x128xf32> to vector<1x128xf32>
    %25 = vector.broadcast %24 : vector<1x128xf32> to vector<8x128xf32>
    %26 = arith.addf %22, %25 : vector<8x128xf32>
    %cst_20 = arith.constant 0.000000e+00 : f32
    %27 = vector.broadcast %cst_20 : f32 to vector<8x128xf32>
    %28 = arith.maximumf %26, %27 : vector<8x128xf32>
    %29 = arith.truncf %28 : vector<8x128xf32> to vector<8x128xbf16>
    %c0_21 = arith.constant 0 : index
    %c0_22 = arith.constant 0 : index
    %30 = vector.load %arg7[%c0_21, %c0_22] : memref<128x128xbf16, #tpu.memory_space<vmem>>, vector<128x128xbf16>
    %cst_23 = arith.constant dense<0.000000e+00> : vector<8x128xf32>
    %31 = tpu.matmul %29, %30, %cst_23 {dimension_numbers = #tpu.dot_dimension_numbers<[1], [0], [0], [1], [0, 0, 1, 1], [], []>} : vector<8x128xbf16>, vector<128x128xbf16>, vector<8x128xf32> -> vector<8x128xf32>
    %c0_24 = arith.constant 0 : index
    %c0_25 = arith.constant 0 : index
    %32 = vector.load %arg8[%c0_24, %c0_25] : memref<1x128xf32, #tpu.memory_space<vmem>>, vector<1x128xf32>
    %33 = vector.broadcast %32 : vector<1x128xf32> to vector<8x128xf32>
    %34 = arith.addf %31, %33 : vector<8x128xf32>
    %cst_26 = arith.constant 0.000000e+00 : f32
    %35 = vector.broadcast %cst_26 : f32 to vector<8x128xf32>
    %36 = arith.maximumf %34, %35 : vector<8x128xf32>
    %c0_27 = arith.constant 0 : index
    %c0_28 = arith.constant 0 : index
    %37 = vector.load %arg9[%c0_27, %c0_28] : memref<8x128xf32, #tpu.memory_space<vmem>>, vector<8x128xf32>
    tpu.vector_store %arg9[%c0_27, %c0_28], %36 {strides = array<i32>} : memref<8x128xf32, #tpu.memory_space<vmem>>, vector<8x128xf32>,
    %c0_29 = arith.constant 0 : index
    %c0_30 = arith.constant 0 : index
    %38 = vector.load %arg2[%c0_29, %c0_30] : memref<8x40xf32, #tpu.memory_space<vmem>>, vector<8x40xf32>
    %39 = arith.truncf %38 : vector<8x40xf32> to vector<8x40xbf16>
    %c0_31 = arith.constant 0 : index
    %c0_32 = arith.constant 0 : index
    %40 = vector.load %arg3[%c0_31, %c0_32] : memref<40x128xbf16, #tpu.memory_space<vmem>>, vector<40x128xbf16>
    %cst_33 = arith.constant dense<0.000000e+00> : vector<8x128xf32>
    %41 = tpu.matmul %39, %40, %cst_33 {dimension_numbers = #tpu.dot_dimension_numbers<[1], [0], [0], [1], [0, 0, 1, 1], [], []>} : vector<8x40xbf16>, vector<40x128xbf16>, vector<8x128xf32> -> vector<8x128xf32>
    %c0_34 = arith.constant 0 : index
    %c0_35 = arith.constant 0 : index
    %42 = vector.load %arg4[%c0_34, %c0_35] : memref<1x128xf32, #tpu.memory_space<vmem>>, vector<1x128xf32>
    %43 = vector.broadcast %42 : vector<1x128xf32> to vector<8x128xf32>
    %44 = arith.addf %41, %43 : vector<8x128xf32>
    %cst_36 = arith.constant 0.000000e+00 : f32
    %45 = vector.broadcast %cst_36 : f32 to vector<8x128xf32>
    %46 = arith.maximumf %44, %45 : vector<8x128xf32>
    %47 = arith.truncf %46 : vector<8x128xf32> to vector<8x128xbf16>
    %c0_37 = arith.constant 0 : index
    %c0_38 = arith.constant 0 : index
    %c0_39 = arith.constant 0 : index
    %48 = vector.load %arg5[%c0_37, %c0_38, %c0_39] : memref<2x128x128xbf16, #tpu.memory_space<vmem>>, vector<1x128x128xbf16>
    %49 = vector.shape_cast %48 : vector<1x128x128xbf16> to vector<128x128xbf16>
    %cst_40 = arith.constant dense<0.000000e+00> : vector<8x128xf32>
    %50 = tpu.matmul %47, %49, %cst_40 {dimension_numbers = #tpu.dot_dimension_numbers<[1], [0], [0], [1], [0, 0, 1, 1], [], []>} : vector<8x128xbf16>, vector<128x128xbf16>, vector<8x128xf32> -> vector<8x128xf32>
    %c0_41 = arith.constant 0 : index
    %c0_42 = arith.constant 0 : index
    %c0_43 = arith.constant 0 : index
    %51 = vector.load %arg6[%c0_41, %c0_42, %c0_43] : memref<2x1x128xf32, #tpu.memory_space<vmem>>, vector<1x1x128xf32>
    %52 = vector.shape_cast %51 : vector<1x1x128xf32> to vector<1x128xf32>
    %53 = vector.broadcast %52 : vector<1x128xf32> to vector<8x128xf32>
    %54 = arith.addf %50, %53 : vector<8x128xf32>
    %cst_44 = arith.constant 0.000000e+00 : f32
    %55 = vector.broadcast %cst_44 : f32 to vector<8x128xf32>
    %56 = arith.maximumf %54, %55 : vector<8x128xf32>
    %57 = arith.truncf %56 : vector<8x128xf32> to vector<8x128xbf16>
    %c1_45 = arith.constant 1 : index
    %c0_46 = arith.constant 0 : index
    %c0_47 = arith.constant 0 : index
    %58 = vector.load %arg5[%c1_45, %c0_46, %c0_47] : memref<2x128x128xbf16, #tpu.memory_space<vmem>>, vector<1x128x128xbf16>
    %59 = vector.shape_cast %58 : vector<1x128x128xbf16> to vector<128x128xbf16>
    %cst_48 = arith.constant dense<0.000000e+00> : vector<8x128xf32>
    %60 = tpu.matmul %57, %59, %cst_48 {dimension_numbers = #tpu.dot_dimension_numbers<[1], [0], [0], [1], [0, 0, 1, 1], [], []>} : vector<8x128xbf16>, vector<128x128xbf16>, vector<8x128xf32> -> vector<8x128xf32>
    %c1_49 = arith.constant 1 : index
    %c0_50 = arith.constant 0 : index
    %c0_51 = arith.constant 0 : index
    %61 = vector.load %arg6[%c1_49, %c0_50, %c0_51] : memref<2x1x128xf32, #tpu.memory_space<vmem>>, vector<1x1x128xf32>
    %62 = vector.shape_cast %61 : vector<1x1x128xf32> to vector<1x128xf32>
    %63 = vector.broadcast %62 : vector<1x128xf32> to vector<8x128xf32>
    %64 = arith.addf %60, %63 : vector<8x128xf32>
    %cst_52 = arith.constant 0.000000e+00 : f32
    %65 = vector.broadcast %cst_52 : f32 to vector<8x128xf32>
    %66 = arith.maximumf %64, %65 : vector<8x128xf32>
    %67 = arith.truncf %66 : vector<8x128xf32> to vector<8x128xbf16>
    %c0_53 = arith.constant 0 : index
    %c0_54 = arith.constant 0 : index
    %68 = vector.load %arg7[%c0_53, %c0_54] : memref<128x128xbf16, #tpu.memory_space<vmem>>, vector<128x128xbf16>
    %cst_55 = arith.constant dense<0.000000e+00> : vector<8x128xf32>
    %69 = tpu.matmul %67, %68, %cst_55 {dimension_numbers = #tpu.dot_dimension_numbers<[1], [0], [0], [1], [0, 0, 1, 1], [], []>} : vector<8x128xbf16>, vector<128x128xbf16>, vector<8x128xf32> -> vector<8x128xf32>
    %c0_56 = arith.constant 0 : index
    %c0_57 = arith.constant 0 : index
    %70 = vector.load %arg8[%c0_56, %c0_57] : memref<1x128xf32, #tpu.memory_space<vmem>>, vector<1x128xf32>
    %71 = vector.broadcast %70 : vector<1x128xf32> to vector<8x128xf32>
    %72 = arith.addf %69, %71 : vector<8x128xf32>
    %cst_58 = arith.constant 0.000000e+00 : f32
    %73 = vector.broadcast %cst_58 : f32 to vector<8x128xf32>
    %74 = arith.maximumf %72, %73 : vector<8x128xf32>
    %c0_59 = arith.constant 0 : index
    %c0_60 = arith.constant 0 : index
    %75 = vector.load %arg10[%c0_59, %c0_60] : memref<8x128xf32, #tpu.memory_space<vmem>>, vector<8x128xf32>
    tpu.vector_store %arg10[%c0_59, %c0_60], %74 {strides = array<i32>} : memref<8x128xf32, #tpu.memory_space<vmem>>, vector<8x128xf32>,
    return
  }
  func.func @transform_0(%arg0: i32) -> (i32, i32) {
    %c0_i32 = arith.constant 0 : i32
    %c0_i32_0 = arith.constant 0 : i32
    return %arg0, %c0_i32 : i32, i32
  }
  func.func @transform_1(%arg0: i32) -> (i32, i32) {
    %c0_i32 = arith.constant 0 : i32
    %c0_i32_0 = arith.constant 0 : i32
    return %arg0, %c0_i32 : i32, i32
  }
  func.func @transform_2(%arg0: i32) -> (i32, i32) {
    %c0_i32 = arith.constant 0 : i32
    %c0_i32_0 = arith.constant 0 : i32
    %c0_i32_1 = arith.constant 0 : i32
    return %c0_i32, %c0_i32_0 : i32, i32
  }
  func.func @transform_3(%arg0: i32) -> (i32, i32) {
    %c0_i32 = arith.constant 0 : i32
    %c0_i32_0 = arith.constant 0 : i32
    %c0_i32_1 = arith.constant 0 : i32
    return %c0_i32, %c0_i32_0 : i32, i32
  }
  func.func @transform_4(%arg0: i32) -> (i32, i32, i32) {
    %c0_i32 = arith.constant 0 : i32
    %c0_i32_0 = arith.constant 0 : i32
    %c0_i32_1 = arith.constant 0 : i32
    %c0_i32_2 = arith.constant 0 : i32
    return %c0_i32, %c0_i32_0, %c0_i32_1 : i32, i32, i32
  }
  func.func @transform_5(%arg0: i32) -> (i32, i32, i32) {
    %c0_i32 = arith.constant 0 : i32
    %c0_i32_0 = arith.constant 0 : i32
    %c0_i32_1 = arith.constant 0 : i32
    %c0_i32_2 = arith.constant 0 : i32
    return %c0_i32, %c0_i32_0, %c0_i32_1 : i32, i32, i32
  }
  func.func @transform_6(%arg0: i32) -> (i32, i32) {
    %c0_i32 = arith.constant 0 : i32
    %c0_i32_0 = arith.constant 0 : i32
    %c0_i32_1 = arith.constant 0 : i32
    return %c0_i32, %c0_i32_0 : i32, i32
  }
  func.func @transform_7(%arg0: i32) -> (i32, i32) {
    %c0_i32 = arith.constant 0 : i32
    %c0_i32_0 = arith.constant 0 : i32
    %c0_i32_1 = arith.constant 0 : i32
    return %c0_i32, %c0_i32_0 : i32, i32
  }
  func.func @transform_8(%arg0: i32) -> (i32, i32) {
    %c0_i32 = arith.constant 0 : i32
    %c0_i32_0 = arith.constant 0 : i32
    return %arg0, %c0_i32 : i32, i32
  }
  func.func @transform_9(%arg0: i32) -> (i32, i32) {
    %c0_i32 = arith.constant 0 : i32
    %c0_i32_0 = arith.constant 0 : i32
    return %arg0, %c0_i32 : i32, i32
  }
}

</mosaic_0001>

<llo_original>
// kernel: siamese_multitask_forward.1
$region0: #{siamese_multitask_forward.1}
  #allocation0 [shape = 'u32[]', space=smem, size = 0x4, offset = 0x4, fixed_abs, tag = 'smem constant byte address 0x4 - core index']
  #allocation1 [shape = 'u32[72,128]{1,0:T(1,128)}', space=vmem, size = 0x9000, scoped, tag = 'internal scratch']
  %s0 = inlined_call_operand.hbm [shape: f32[8,40], index: 0, kind: input, shape index: {}]
  %s1 = inlined_call_operand.hbm [shape: f32[8,40], index: 1, kind: input, shape index: {}]
  %s2 = inlined_call_operand.hbm [shape: bf16[40,128], index: 2, kind: input, shape index: {}]
  %s3 = inlined_call_operand.vmem [shape: f32[1,128], index: 3, kind: input, shape index: {}]
  %s4 = inlined_call_operand.hbm [shape: bf16[2,128,128], index: 4, kind: input, shape index: {}]
  %s5 = inlined_call_operand.vmem [shape: f32[2,1,128], index: 5, kind: input, shape index: {}]
  %s6 = inlined_call_operand.hbm [shape: bf16[128,128], index: 6, kind: input, shape index: {}]
  %s7 = inlined_call_operand.hbm [shape: f32[1,128], index: 7, kind: input, shape index: {}]
  %s8 = inlined_call_operand.vmem [shape: f32[8,128], index: 8, kind: output, shape index: {0}]
  %s9 = inlined_call_operand.vmem [shape: f32[8,128], index: 9, kind: output, shape index: {1}]
  %10 = xla_tuple %s8, %s9
  %s11 = sld [smem:[#allocation0]]
  $region74: #{siamese_multitask_forward.1} parent=0
    _
  %s13 = ssub.s32 1, %s11
  %s14 = scalar_select 0, %s13, %s11
  $region1: #{siamese_multitask_forward.1} parent=0
    #allocation2 [shape = 'u8[4096]{0}', space=vmem, size = 0x1000, scoped, tag = 'input window, operand 0, single buffered']
    #allocation3 [shape = 's32[1]{0}', space=sflag, size = 0x4, scoped, tag = 'scoped memory for siamese_multitask_forward.1']
    #allocation4 [shape = 'u8[4096]{0}', space=vmem, size = 0x1000, scoped, tag = 'input window, operand 1, single buffered']
    #allocation5 [shape = 's32[1]{0}', space=sflag, size = 0x4, scoped, tag = 'scoped memory for siamese_multitask_forward.1']
    #allocation6 [shape = 'u8[10240]{0}', space=vmem, size = 0x2800, scoped, tag = 'input window, operand 2, single buffered']
    #allocation7 [shape = 'u8[65536]{0}', space=vmem, size = 0x10000, scoped, tag = 'input window, operand 4, single buffered']
    #allocation8 [shape = 's32[1]{0}', space=sflag, size = 0x4, scoped, tag = 'scoped memory for siamese_multitask_forward.1']
    #allocation9 [shape = 'u8[32768]{0}', space=vmem, size = 0x8000, scoped, tag = 'input window, operand 6, single buffered']
    #allocation10 [shape = 'u8[512]{0}', space=vmem, size = 0x400, scoped, tag = 'input window, operand 7, single buffered']
    #allocation11 [shape = 's32[1]{0}', space=sflag, size = 0x4, scoped, tag = 'scoped memory for siamese_multitask_forward.1']
    %15 = vsyncpa [#allocation3], 0
    %16 = vsyncpa [#allocation5], 0
    %17 = vsyncpa [#allocation8], 0
    %18 = vsyncpa [#allocation11], 0
    // Predicated region
    $region2: #{siamese_multitask_forward.1} parent=1 // pred_check
      _
    $region3: #{siamese_multitask_forward.1} parent=1 // pred_check_branch
      %20 = sbr.rel (0) target = $region5
    $region4: #{siamese_multitask_forward.1} parent=1 // pred_region
      %22 = vsyncadd [#allocation3], 0
      %s24 = sshll.u32 %s0, 4
      %s25 = int_to_ptr.hbm [resolvable:$true] %s24
      %s26 = sshll.u32 [#allocation2], 4
      %s27 = int_to_ptr.vmem [resolvable:$true] %s26
      %29 = dma.hbm_to_vmem [thread:$0]  %s25, 128, %s27, [#allocation3]
    $region5: #{siamese_multitask_forward.1} parent=1 // pred_fallthru
      _
    // Predicated region
    $region6: #{siamese_multitask_forward.1} parent=1 // pred_check
      _
    $region7: #{siamese_multitask_forward.1} parent=1 // pred_check_branch
      %31 = sbr.rel (0) target = $region9
    $region8: #{siamese_multitask_forward.1} parent=1 // pred_region
      %33 = vsyncadd [#allocation5], 0
      %s35 = sshll.u32 %s1, 4
      %s36 = int_to_ptr.hbm [resolvable:$true] %s35
      %s37 = sshll.u32 [#allocation4], 4
      %s38 = int_to_ptr.vmem [resolvable:$true] %s37
      %40 = dma.hbm_to_vmem [thread:$0]  %s36, 128, %s38, [#allocation5]
    $region9: #{siamese_multitask_forward.1} parent=1 // pred_fallthru
      _
    // Predicated region
    $region10: #{siamese_multitask_forward.1} parent=1 // pred_check
      _
    $region11: #{siamese_multitask_forward.1} parent=1 // pred_check_branch
      %42 = sbr.rel (0) target = $region13
    $region12: #{siamese_multitask_forward.1} parent=1 // pred_region
      %44 = vsyncadd [#allocation5], 0
      %s45 = sshll.u32 %s2, 4
      %s46 = int_to_ptr.hbm [resolvable:$true] %s45
      %s47 = sshll.u32 [#allocation6], 4
      %s48 = int_to_ptr.vmem [resolvable:$true] %s47
      %53 = dma.hbm_to_vmem [thread:$0]  %s46, 320, %s48, [#allocation5], 64, 64, 4
    $region13: #{siamese_multitask_forward.1} parent=1 // pred_fallthru
      _
    // Predicated region
    $region14: #{siamese_multitask_forward.1} parent=1 // pred_check
      _
    $region15: #{siamese_multitask_forward.1} parent=1 // pred_check_branch
      %55 = sbr.rel (0) target = $region17
    $region16: #{siamese_multitask_forward.1} parent=1 // pred_region
      _
    $region17: #{siamese_multitask_forward.1} parent=1 // pred_fallthru
      _
    // Predicated region
    $region18: #{siamese_multitask_forward.1} parent=1 // pred_check
      _
    $region19: #{siamese_multitask_forward.1} parent=1 // pred_check_branch
      %57 = sbr.rel (0) target = $region21
    $region20: #{siamese_multitask_forward.1} parent=1 // pred_region
      %59 = vsyncadd [#allocation8], 0
      %s60 = sshll.u32 %s4, 4
      %s61 = int_to_ptr.hbm [resolvable:$true] %s60
      %s62 = sshll.u32 [#allocation7], 4
      %s63 = int_to_ptr.vmem [resolvable:$true] %s62
      %68 = dma.hbm_to_vmem [thread:$0]  %s61, 2048, %s63, [#allocation8], 64, 64, 4
    $region21: #{siamese_multitask_forward.1} parent=1 // pred_fallthru
      _
    // Predicated region
    $region22: #{siamese_multitask_forward.1} parent=1 // pred_check
      _
    $region23: #{siamese_multitask_forward.1} parent=1 // pred_check_branch
      %70 = sbr.rel (0) target = $region25
    $region24: #{siamese_multitask_forward.1} parent=1 // pred_region
      _
    $region25: #{siamese_multitask_forward.1} parent=1 // pred_fallthru
      _
    // Predicated region
    $region26: #{siamese_multitask_forward.1} parent=1 // pred_check
      _
    $region27: #{siamese_multitask_forward.1} parent=1 // pred_check_branch
      %72 = sbr.rel (0) target = $region29
    $region28: #{siamese_multitask_forward.1} parent=1 // pred_region
      %74 = vsyncadd [#allocation8], 0
      %s75 = sshll.u32 %s6, 4
      %s76 = int_to_ptr.hbm [resolvable:$true] %s75
      %s77 = sshll.u32 [#allocation9], 4
      %s78 = int_to_ptr.vmem [resolvable:$true] %s77
      %83 = dma.hbm_to_vmem [thread:$0]  %s76, 1024, %s78, [#allocation8], 64, 64, 4
    $region29: #{siamese_multitask_forward.1} parent=1 // pred_fallthru
      _
    // Predicated region
    $region30: #{siamese_multitask_forward.1} parent=1 // pred_check
      _
    $region31: #{siamese_multitask_forward.1} parent=1 // pred_check_branch
      %85 = sbr.rel (0) target = $region33
    $region32: #{siamese_multitask_forward.1} parent=1 // pred_region
      %87 = vsyncadd [#allocation11], 0
      %s89 = sshll.u32 %s7, 4
      %s90 = int_to_ptr.hbm [resolvable:$true] %s89
      %s91 = sshll.u32 [#allocation10], 4
      %s92 = int_to_ptr.vmem [resolvable:$true] %s91
      %94 = dma.hbm_to_vmem [thread:$0]  %s90, 16, %s92, [#allocation11]
    $region33: #{siamese_multitask_forward.1} parent=1 // pred_fallthru
      _
    // Predicated region
    $region34: #{siamese_multitask_forward.1} parent=1 // pred_check
      _
    $region35: #{siamese_multitask_forward.1} parent=1 // pred_check_branch
      %96 = sbr.rel (0) target = $region37
    $region36: #{siamese_multitask_forward.1} parent=1 // pred_region
      %98 = dma.done [#allocation3], 128
    $region37: #{siamese_multitask_forward.1} parent=1 // pred_fallthru
      _
    // Predicated region
    $region38: #{siamese_multitask_forward.1} parent=1 // pred_check
      _
    $region39: #{siamese_multitask_forward.1} parent=1 // pred_check_branch
      %100 = sbr.rel (0) target = $region41
    $region40: #{siamese_multitask_forward.1} parent=1 // pred_region
      %102 = dma.done [#allocation5], 128
    $region41: #{siamese_multitask_forward.1} parent=1 // pred_fallthru
      _
    // Predicated region
    $region42: #{siamese_multitask_forward.1} parent=1 // pred_check
      _
    $region43: #{siamese_multitask_forward.1} parent=1 // pred_check_branch
      %104 = sbr.rel (0) target = $region45
    $region44: #{siamese_multitask_forward.1} parent=1 // pred_region
      %106 = dma.done [#allocation5], 320
    $region45: #{siamese_multitask_forward.1} parent=1 // pred_fallthru
      _
    // Predicated region
    $region46: #{siamese_multitask_forward.1} parent=1 // pred_check
      _
    $region47: #{siamese_multitask_forward.1} parent=1 // pred_check_branch
      %108 = sbr.rel (0) target = $region49
    $region48: #{siamese_multitask_forward.1} parent=1 // pred_region
      %110 = dma.done [#allocation8], 2048
    $region49: #{siamese_multitask_forward.1} parent=1 // pred_fallthru
      _
    // Predicated region
    $region50: #{siamese_multitask_forward.1} parent=1 // pred_check
      _
    $region51: #{siamese_multitask_forward.1} parent=1 // pred_check_branch
      %112 = sbr.rel (0) target = $region53
    $region52: #{siamese_multitask_forward.1} parent=1 // pred_region
      %114 = dma.done [#allocation8], 1024
    $region53: #{siamese_multitask_forward.1} parent=1 // pred_fallthru
      _
    // Predicated region
    $region54: #{siamese_multitask_forward.1} parent=1 // pred_check
      _
    $region55: #{siamese_multitask_forward.1} parent=1 // pred_check_branch
      %116 = sbr.rel (0) target = $region57
    $region56: #{siamese_multitask_forward.1} parent=1 // pred_region
      %118 = dma.done [#allocation11], 16
    $region57: #{siamese_multitask_forward.1} parent=1 // pred_fallthru
      _
    %v120 = vld [vmem:[#allocation2] sm:$0xff]
    %v121 = vpack.c.bf16 %v120, %v120
    %v122 = vld [vmem:[#allocation6] sm:$0xf]
    %v123 = vld [vmem:[#allocation6 + $0x4] sm:$0xf]
    %v124 = vld [vmem:[#allocation6 + $0x8] sm:$0xf]
    %v125 = vld [vmem:[#allocation6 + $0xc] sm:$0xf]
    %v126 = vld [vmem:[#allocation6 + $0x10] sm:$0xf]
    %v127 = vld [vmem:[%s3] sm:$0x1]
    %v129 = vperm.slane %v127, 0
    %v136 = vunpack.c.l.b16 %v122
    %v137 = vunpack.c.l.b16 %v123
    %v138 = vunpack.c.l.b16 %v124
    %v139 = vunpack.c.l.b16 %v125
    %v140 = vunpack.c.l.b16 %v126
    %v141 = vpack.c.b16 %v137, %v136
    %v142 = vpack.c.b16 %v139, %v138
    %v143 = vpack.c.b16 %v140, %v140
    %vm146 = vcmask 326656
    %v148 = vsel %vm146, %v121, 0
    %vm150 = vcmask 1043456
    %v152 = vsel %vm150, %v143, 0
    %154 = vmatpush.bf16.msra.mxu0 0
    %155 = vmatpush.bf16.msra.mxu0 0
    %156 = vmatpush.bf16.msra.mxu0 0
    %157 = vmatpush.bf16.msra.mxu0 0
    %158 = vmatpush.bf16.msra.mxu0 0
    %159 = vmatpush.bf16.msra.mxu0 %v152
    %160 = vmatpush.bf16.msra.mxu0 %v142
    %161 = vmatpush.bf16.msra.mxu0 %v141
    %162 = vmatmul.bf16.gmra.mxu0 %v148
    %v163 = vpop.f32.mrf.mxu0
    %v164 = vadd.f32 %v129, %v163
    %v165 = vpop.f32.mrf.mxu0
    %166 = vdwg.mxu0
    %v167 = vmax.f32 %v164, 0.0
    %v168 = vpack.c.bf16 %v167, %v167
    %v169 = vld [vmem:[#allocation7] sm:$0xf]
    %v170 = vld [vmem:[#allocation7 + $0x4] sm:$0xf]
    %v171 = vld [vmem:[#allocation7 + $0x8] sm:$0xf]
    %v172 = vld [vmem:[#allocation7 + $0xc] sm:$0xf]
    %v173 = vld [vmem:[#allocation7 + $0x10] sm:$0xf]
    %v174 = vld [vmem:[#allocation7 + $0x14] sm:$0xf]
    %v175 = vld [vmem:[#allocation7 + $0x18] sm:$0xf]
    %v176 = vld [vmem:[#allocation7 + $0x1c] sm:$0xf]
    %v177 = vld [vmem:[#allocation7 + $0x20] sm:$0xf]
    %v178 = vld [vmem:[#allocation7 + $0x24] sm:$0xf]
    %v179 = vld [vmem:[#allocation7 + $0x28] sm:$0xf]
    %v180 = vld [vmem:[#allocation7 + $0x2c] sm:$0xf]
    %v181 = vld [vmem:[#allocation7 + $0x30] sm:$0xf]
    %v182 = vld [vmem:[#allocation7 + $0x34] sm:$0xf]
    %v183 = vld [vmem:[#allocation7 + $0x38] sm:$0xf]
    %v184 = vld [vmem:[#allocation7 + $0x3c] sm:$0xf]
    %v185 = vld [vmem:[%s5] sm:$0x1]
    %v187 = vperm.slane %v185, 0
    %v205 = vunpack.c.l.b16 %v169
    %v206 = vunpack.c.l.b16 %v170
    %v207 = vunpack.c.l.b16 %v171
    %v208 = vunpack.c.l.b16 %v172
    %v209 = vunpack.c.l.b16 %v173
    %v210 = vunpack.c.l.b16 %v174
    %v211 = vunpack.c.l.b16 %v175
    %v212 = vunpack.c.l.b16 %v176
    %v213 = vunpack.c.l.b16 %v177
    %v214 = vunpack.c.l.b16 %v178
    %v215 = vunpack.c.l.b16 %v179
    %v216 = vunpack.c.l.b16 %v180
    %v217 = vunpack.c.l.b16 %v181
    %v218 = vunpack.c.l.b16 %v182
    %v219 = vunpack.c.l.b16 %v183
    %v220 = vunpack.c.l.b16 %v184
    %v221 = vpack.c.b16 %v206, %v205
    %v222 = vpack.c.b16 %v208, %v207
    %v223 = vpack.c.b16 %v210, %v209
    %v224 = vpack.c.b16 %v212, %v211
    %v225 = vpack.c.b16 %v214, %v213
    %v226 = vpack.c.b16 %v216, %v215
    %v227 = vpack.c.b16 %v218, %v217
    %v228 = vpack.c.b16 %v220, %v219
    %237 = vmatpush.bf16.msra.mxu0 %v228
    %238 = vmatpush.bf16.msra.mxu0 %v227
    %239 = vmatpush.bf16.msra.mxu0 %v226
    %240 = vmatpush.bf16.msra.mxu0 %v225
    %241 = vmatpush.bf16.msra.mxu0 %v224
    %242 = vmatpush.bf16.msra.mxu0 %v223
    %243 = vmatpush.bf16.msra.mxu0 %v222
    %244 = vmatpush.bf16.msra.mxu0 %v221
    %245 = vmatmul.bf16.gmra.mxu0 %v168
    %v246 = vpop.f32.mrf.mxu0
    %v247 = vadd.f32 %v187, %v246
    %v248 = vpop.f32.mrf.mxu0
    %249 = vdwg.mxu0
    %v250 = vmax.f32 %v247, 0.0
    %v251 = vpack.c.bf16 %v250, %v250
    %s252 = scalar_lea.vmem [#allocation7], 64
    %v253 = vld [vmem:[%s252] sm:$0xf]
    %v254 = vld [vmem:[%s252 + $0x4] sm:$0xf]
    %v255 = vld [vmem:[%s252 + $0x8] sm:$0xf]
    %v256 = vld [vmem:[%s252 + $0xc] sm:$0xf]
    %v257 = vld [vmem:[%s252 + $0x10] sm:$0xf]
    %v258 = vld [vmem:[%s252 + $0x14] sm:$0xf]
    %v259 = vld [vmem:[%s252 + $0x18] sm:$0xf]
    %v260 = vld [vmem:[%s252 + $0x1c] sm:$0xf]
    %v261 = vld [vmem:[%s252 + $0x20] sm:$0xf]
    %v262 = vld [vmem:[%s252 + $0x24] sm:$0xf]
    %v263 = vld [vmem:[%s252 + $0x28] sm:$0xf]
    %v264 = vld [vmem:[%s252 + $0x2c] sm:$0xf]
    %v265 = vld [vmem:[%s252 + $0x30] sm:$0xf]
    %v266 = vld [vmem:[%s252 + $0x34] sm:$0xf]
    %v267 = vld [vmem:[%s252 + $0x38] sm:$0xf]
    %v268 = vld [vmem:[%s252 + $0x3c] sm:$0xf]
    %s269 = scalar_lea.vmem %s5, 1
    %v270 = vld [vmem:[%s269] sm:$0x1]
    %v272 = vperm.slane %v270, 0
    %v290 = vunpack.c.l.b16 %v253
    %v291 = vunpack.c.l.b16 %v254
    %v292 = vunpack.c.l.b16 %v255
    %v293 = vunpack.c.l.b16 %v256
    %v294 = vunpack.c.l.b16 %v257
    %v295 = vunpack.c.l.b16 %v258
    %v296 = vunpack.c.l.b16 %v259
    %v297 = vunpack.c.l.b16 %v260
    %v298 = vunpack.c.l.b16 %v261
    %v299 = vunpack.c.l.b16 %v262
    %v300 = vunpack.c.l.b16 %v263
    %v301 = vunpack.c.l.b16 %v264
    %v302 = vunpack.c.l.b16 %v265
    %v303 = vunpack.c.l.b16 %v266
    %v304 = vunpack.c.l.b16 %v267
    %v305 = vunpack.c.l.b16 %v268
    %v306 = vpack.c.b16 %v291, %v290
    %v307 = vpack.c.b16 %v293, %v292
    %v308 = vpack.c.b16 %v295, %v294
    %v309 = vpack.c.b16 %v297, %v296
    %v310 = vpack.c.b16 %v299, %v298
    %v311 = vpack.c.b16 %v301, %v300
    %v312 = vpack.c.b16 %v303, %v302
    %v313 = vpack.c.b16 %v305, %v304
    %322 = vmatpush.bf16.msra.mxu0 %v313
    %323 = vmatpush.bf16.msra.mxu0 %v312
    %324 = vmatpush.bf16.msra.mxu0 %v311
    %325 = vmatpush.bf16.msra.mxu0 %v310
    %326 = vmatpush.bf16.msra.mxu0 %v309
    %327 = vmatpush.bf16.msra.mxu0 %v308
    %328 = vmatpush.bf16.msra.mxu0 %v307
    %329 = vmatpush.bf16.msra.mxu0 %v306
    %330 = vmatmul.bf16.gmra.mxu0 %v251
    %v331 = vpop.f32.mrf.mxu0
    %v332 = vadd.f32 %v272, %v331
    %v333 = vpop.f32.mrf.mxu0
    %334 = vdwg.mxu0
    %v335 = vmax.f32 %v332, 0.0
    %v336 = vpack.c.bf16 %v335, %v335
    %v337 = vld [vmem:[#allocation9] sm:$0xf]
    %v338 = vld [vmem:[#allocation9 + $0x4] sm:$0xf]
    %v339 = vld [vmem:[#allocation9 + $0x8] sm:$0xf]
    %v340 = vld [vmem:[#allocation9 + $0xc] sm:$0xf]
    %v341 = vld [vmem:[#allocation9 + $0x10] sm:$0xf]
    %v342 = vld [vmem:[#allocation9 + $0x14] sm:$0xf]
    %v343 = vld [vmem:[#allocation9 + $0x18] sm:$0xf]
    %v344 = vld [vmem:[#allocation9 + $0x1c] sm:$0xf]
    %v345 = vld [vmem:[#allocation9 + $0x20] sm:$0xf]
    %v346 = vld [vmem:[#allocation9 + $0x24] sm:$0xf]
    %v347 = vld [vmem:[#allocation9 + $0x28] sm:$0xf]
    %v348 = vld [vmem:[#allocation9 + $0x2c] sm:$0xf]
    %v349 = vld [vmem:[#allocation9 + $0x30] sm:$0xf]
    %v350 = vld [vmem:[#allocation9 + $0x34] sm:$0xf]
    %v351 = vld [vmem:[#allocation9 + $0x38] sm:$0xf]
    %v352 = vld [vmem:[#allocation9 + $0x3c] sm:$0xf]
    %v353 = vld [vmem:[#allocation10] sm:$0x1]
    %v355 = vperm.slane %v353, 0
    %v373 = vunpack.c.l.b16 %v337
    %v374 = vunpack.c.l.b16 %v338
    %v375 = vunpack.c.l.b16 %v339
    %v376 = vunpack.c.l.b16 %v340
    %v377 = vunpack.c.l.b16 %v341
    %v378 = vunpack.c.l.b16 %v342
    %v379 = vunpack.c.l.b16 %v343
    %v380 = vunpack.c.l.b16 %v344
    %v381 = vunpack.c.l.b16 %v345
    %v382 = vunpack.c.l.b16 %v346
    %v383 = vunpack.c.l.b16 %v347
    %v384 = vunpack.c.l.b16 %v348
    %v385 = vunpack.c.l.b16 %v349
    %v386 = vunpack.c.l.b16 %v350
    %v387 = vunpack.c.l.b16 %v351
    %v388 = vunpack.c.l.b16 %v352
    %v389 = vpack.c.b16 %v374, %v373
    %v390 = vpack.c.b16 %v376, %v375
    %v391 = vpack.c.b16 %v378, %v377
    %v392 = vpack.c.b16 %v380, %v379
    %v393 = vpack.c.b16 %v382, %v381
    %v394 = vpack.c.b16 %v384, %v383
    %v395 = vpack.c.b16 %v386, %v385
    %v396 = vpack.c.b16 %v388, %v387
    %405 = vmatpush.bf16.msra.mxu0 %v396
    %406 = vmatpush.bf16.msra.mxu0 %v395
    %407 = vmatpush.bf16.msra.mxu0 %v394
    %408 = vmatpush.bf16.msra.mxu0 %v393
    %409 = vmatpush.bf16.msra.mxu0 %v392
    %410 = vmatpush.bf16.msra.mxu0 %v391
    %411 = vmatpush.bf16.msra.mxu0 %v390
    %412 = vmatpush.bf16.msra.mxu0 %v389
    %413 = vmatmul.bf16.gmra.mxu0 %v336
    %v414 = vpop.f32.mrf.mxu0
    %v415 = vadd.f32 %v355, %v414
    %v416 = vpop.f32.mrf.mxu0
    %417 = vdwg.mxu0
    %v418 = vmax.f32 %v415, 0.0
    %419 = vst [vmem:[%s8] sm:$0xff] %v418
    %v420 = vld [vmem:[#allocation4] sm:$0xff]
    %v421 = vpack.c.bf16 %v420, %v420
    %v422 = vld [vmem:[#allocation6] sm:$0xf]
    %v423 = vld [vmem:[#allocation6 + $0x4] sm:$0xf]
    %v424 = vld [vmem:[#allocation6 + $0x8] sm:$0xf]
    %v425 = vld [vmem:[#allocation6 + $0xc] sm:$0xf]
    %v426 = vld [vmem:[#allocation6 + $0x10] sm:$0xf]
    %v427 = vld [vmem:[%s3] sm:$0x1]
    %v429 = vperm.slane %v427, 0
    %v436 = vunpack.c.l.b16 %v422
    %v437 = vunpack.c.l.b16 %v423
    %v438 = vunpack.c.l.b16 %v424
    %v439 = vunpack.c.l.b16 %v425
    %v440 = vunpack.c.l.b16 %v426
    %v441 = vpack.c.b16 %v437, %v436
    %v442 = vpack.c.b16 %v439, %v438
    %v443 = vpack.c.b16 %v440, %v440
    %v447 = vsel %vm146, %v421, 0
    %v450 = vsel %vm150, %v443, 0
    %452 = vmatpush.bf16.msra.mxu0 0
    %453 = vmatpush.bf16.msra.mxu0 0
    %454 = vmatpush.bf16.msra.mxu0 0
    %455 = vmatpush.bf16.msra.mxu0 0
    %456 = vmatpush.bf16.msra.mxu0 0
    %457 = vmatpush.bf16.msra.mxu0 %v450
    %458 = vmatpush.bf16.msra.mxu0 %v442
    %459 = vmatpush.bf16.msra.mxu0 %v441
    %460 = vmatmul.bf16.gmra.mxu0 %v447
    %v461 = vpop.f32.mrf.mxu0
    %v462 = vadd.f32 %v429, %v461
    %v463 = vpop.f32.mrf.mxu0
    %464 = vdwg.mxu0
    %v465 = vmax.f32 %v462, 0.0
    %v466 = vpack.c.bf16 %v465, %v465
    %v467 = vld [vmem:[#allocation7] sm:$0xf]
    %v468 = vld [vmem:[#allocation7 + $0x4] sm:$0xf]
    %v469 = vld [vmem:[#allocation7 + $0x8] sm:$0xf]
    %v470 = vld [vmem:[#allocation7 + $0xc] sm:$0xf]
    %v471 = vld [vmem:[#allocation7 + $0x10] sm:$0xf]
    %v472 = vld [vmem:[#allocation7 + $0x14] sm:$0xf]
    %v473 = vld [vmem:[#allocation7 + $0x18] sm:$0xf]
    %v474 = vld [vmem:[#allocation7 + $0x1c] sm:$0xf]
    %v475 = vld [vmem:[#allocation7 + $0x20] sm:$0xf]
    %v476 = vld [vmem:[#allocation7 + $0x24] sm:$0xf]
    %v477 = vld [vmem:[#allocation7 + $0x28] sm:$0xf]
    %v478 = vld [vmem:[#allocation7 + $0x2c] sm:$0xf]
    %v479 = vld [vmem:[#allocation7 + $0x30] sm:$0xf]
    %v480 = vld [vmem:[#allocation7 + $0x34] sm:$0xf]
    %v481 = vld [vmem:[#allocation7 + $0x38] sm:$0xf]
    %v482 = vld [vmem:[#allocation7 + $0x3c] sm:$0xf]
    %v483 = vld [vmem:[%s5] sm:$0x1]
    %v485 = vperm.slane %v483, 0
    %v503 = vunpack.c.l.b16 %v467
    %v504 = vunpack.c.l.b16 %v468
    %v505 = vunpack.c.l.b16 %v469
    %v506 = vunpack.c.l.b16 %v470
    %v507 = vunpack.c.l.b16 %v471
    %v508 = vunpack.c.l.b16 %v472
    %v509 = vunpack.c.l.b16 %v473
    %v510 = vunpack.c.l.b16 %v474
    %v511 = vunpack.c.l.b16 %v475
    %v512 = vunpack.c.l.b16 %v476
    %v513 = vunpack.c.l.b16 %v477
    %v514 = vunpack.c.l.b16 %v478
    %v515 = vunpack.c.l.b16 %v479
    %v516 = vunpack.c.l.b16 %v480
    %v517 = vunpack.c.l.b16 %v481
    %v518 = vunpack.c.l.b16 %v482
    %v519 = vpack.c.b16 %v504, %v503
    %v520 = vpack.c.b16 %v506, %v505
    %v521 = vpack.c.b16 %v508, %v507
    %v522 = vpack.c.b16 %v510, %v509
    %v523 = vpack.c.b16 %v512, %v511
    %v524 = vpack.c.b16 %v514, %v513
    %v525 = vpack.c.b16 %v516, %v515
    %v526 = vpack.c.b16 %v518, %v517
    %535 = vmatpush.bf16.msra.mxu0 %v526
    %536 = vmatpush.bf16.msra.mxu0 %v525
    %537 = vmatpush.bf16.msra.mxu0 %v524
    %538 = vmatpush.bf16.msra.mxu0 %v523
    %539 = vmatpush.bf16.msra.mxu0 %v522
    %540 = vmatpush.bf16.msra.mxu0 %v521
    %541 = vmatpush.bf16.msra.mxu0 %v520
    %542 = vmatpush.bf16.msra.mxu0 %v519
    %543 = vmatmul.bf16.gmra.mxu0 %v466
    %v544 = vpop.f32.mrf.mxu0
    %v545 = vadd.f32 %v485, %v544
    %v546 = vpop.f32.mrf.mxu0
    %547 = vdwg.mxu0
    %v548 = vmax.f32 %v545, 0.0
    %v549 = vpack.c.bf16 %v548, %v548
    %v550 = vld [vmem:[%s252] sm:$0xf]
    %v551 = vld [vmem:[%s252 + $0x4] sm:$0xf]
    %v552 = vld [vmem:[%s252 + $0x8] sm:$0xf]
    %v553 = vld [vmem:[%s252 + $0xc] sm:$0xf]
    %v554 = vld [vmem:[%s252 + $0x10] sm:$0xf]
    %v555 = vld [vmem:[%s252 + $0x14] sm:$0xf]
    %v556 = vld [vmem:[%s252 + $0x18] sm:$0xf]
    %v557 = vld [vmem:[%s252 + $0x1c] sm:$0xf]
    %v558 = vld [vmem:[%s252 + $0x20] sm:$0xf]
    %v559 = vld [vmem:[%s252 + $0x24] sm:$0xf]
    %v560 = vld [vmem:[%s252 + $0x28] sm:$0xf]
    %v561 = vld [vmem:[%s252 + $0x2c] sm:$0xf]
    %v562 = vld [vmem:[%s252 + $0x30] sm:$0xf]
    %v563 = vld [vmem:[%s252 + $0x34] sm:$0xf]
    %v564 = vld [vmem:[%s252 + $0x38] sm:$0xf]
    %v565 = vld [vmem:[%s252 + $0x3c] sm:$0xf]
    %v566 = vld [vmem:[%s269] sm:$0x1]
    %v568 = vperm.slane %v566, 0
    %v586 = vunpack.c.l.b16 %v550
    %v587 = vunpack.c.l.b16 %v551
    %v588 = vunpack.c.l.b16 %v552
    %v589 = vunpack.c.l.b16 %v553
    %v590 = vunpack.c.l.b16 %v554
    %v591 = vunpack.c.l.b16 %v555
    %v592 = vunpack.c.l.b16 %v556
    %v593 = vunpack.c.l.b16 %v557
    %v594 = vunpack.c.l.b16 %v558
    %v595 = vunpack.c.l.b16 %v559
    %v596 = vunpack.c.l.b16 %v560
    %v597 = vunpack.c.l.b16 %v561
    %v598 = vunpack.c.l.b16 %v562
    %v599 = vunpack.c.l.b16 %v563
    %v600 = vunpack.c.l.b16 %v564
    %v601 = vunpack.c.l.b16 %v565
    %v602 = vpack.c.b16 %v587, %v586
    %v603 = vpack.c.b16 %v589, %v588
    %v604 = vpack.c.b16 %v591, %v590
    %v605 = vpack.c.b16 %v593, %v592
    %v606 = vpack.c.b16 %v595, %v594
    %v607 = vpack.c.b16 %v597, %v596
    %v608 = vpack.c.b16 %v599, %v598
    %v609 = vpack.c.b16 %v601, %v600
    %618 = vmatpush.bf16.msra.mxu0 %v609
    %619 = vmatpush.bf16.msra.mxu0 %v608
    %620 = vmatpush.bf16.msra.mxu0 %v607
    %621 = vmatpush.bf16.msra.mxu0 %v606
    %622 = vmatpush.bf16.msra.mxu0 %v605
    %623 = vmatpush.bf16.msra.mxu0 %v604
    %624 = vmatpush.bf16.msra.mxu0 %v603
    %625 = vmatpush.bf16.msra.mxu0 %v602
    %626 = vmatmul.bf16.gmra.mxu0 %v549
    %v627 = vpop.f32.mrf.mxu0
    %v628 = vadd.f32 %v568, %v627
    %v629 = vpop.f32.mrf.mxu0
    %630 = vdwg.mxu0
    %v631 = vmax.f32 %v628, 0.0
    %v632 = vpack.c.bf16 %v631, %v631
    %v633 = vld [vmem:[#allocation9] sm:$0xf]
    %v634 = vld [vmem:[#allocation9 + $0x4] sm:$0xf]
    %v635 = vld [vmem:[#allocation9 + $0x8] sm:$0xf]
    %v636 = vld [vmem:[#allocation9 + $0xc] sm:$0xf]
    %v637 = vld [vmem:[#allocation9 + $0x10] sm:$0xf]
    %v638 = vld [vmem:[#allocation9 + $0x14] sm:$0xf]
    %v639 = vld [vmem:[#allocation9 + $0x18] sm:$0xf]
    %v640 = vld [vmem:[#allocation9 + $0x1c] sm:$0xf]
    %v641 = vld [vmem:[#allocation9 + $0x20] sm:$0xf]
    %v642 = vld [vmem:[#allocation9 + $0x24] sm:$0xf]
    %v643 = vld [vmem:[#allocation9 + $0x28] sm:$0xf]
    %v644 = vld [vmem:[#allocation9 + $0x2c] sm:$0xf]
    %v645 = vld [vmem:[#allocation9 + $0x30] sm:$0xf]
    %v646 = vld [vmem:[#allocation9 + $0x34] sm:$0xf]
    %v647 = vld [vmem:[#allocation9 + $0x38] sm:$0xf]
    %v648 = vld [vmem:[#allocation9 + $0x3c] sm:$0xf]
    %v649 = vld [vmem:[#allocation10] sm:$0x1]
    %v651 = vperm.slane %v649, 0
    %v669 = vunpack.c.l.b16 %v633
    %v670 = vunpack.c.l.b16 %v634
    %v671 = vunpack.c.l.b16 %v635
    %v672 = vunpack.c.l.b16 %v636
    %v673 = vunpack.c.l.b16 %v637
    %v674 = vunpack.c.l.b16 %v638
    %v675 = vunpack.c.l.b16 %v639
    %v676 = vunpack.c.l.b16 %v640
    %v677 = vunpack.c.l.b16 %v641
    %v678 = vunpack.c.l.b16 %v642
    %v679 = vunpack.c.l.b16 %v643
    %v680 = vunpack.c.l.b16 %v644
    %v681 = vunpack.c.l.b16 %v645
    %v682 = vunpack.c.l.b16 %v646
    %v683 = vunpack.c.l.b16 %v647
    %v684 = vunpack.c.l.b16 %v648
    %v685 = vpack.c.b16 %v670, %v669
    %v686 = vpack.c.b16 %v672, %v671
    %v687 = vpack.c.b16 %v674, %v673
    %v688 = vpack.c.b16 %v676, %v675
    %v689 = vpack.c.b16 %v678, %v677
    %v690 = vpack.c.b16 %v680, %v679
    %v691 = vpack.c.b16 %v682, %v681
    %v692 = vpack.c.b16 %v684, %v683
    %701 = vmatpush.bf16.msra.mxu0 %v692
    %702 = vmatpush.bf16.msra.mxu0 %v691
    %703 = vmatpush.bf16.msra.mxu0 %v690
    %704 = vmatpush.bf16.msra.mxu0 %v689
    %705 = vmatpush.bf16.msra.mxu0 %v688
    %706 = vmatpush.bf16.msra.mxu0 %v687
    %707 = vmatpush.bf16.msra.mxu0 %v686
    %708 = vmatpush.bf16.msra.mxu0 %v685
    %709 = vmatmul.bf16.gmra.mxu0 %v632
    %v710 = vpop.f32.mrf.mxu0
    %v711 = vadd.f32 %v651, %v710
    %v712 = vpop.f32.mrf.mxu0
    %713 = vdwg.mxu0
    %v714 = vmax.f32 %v711, 0.0
    %715 = vst [vmem:[%s9] sm:$0xff] %v714
    // Predicated region
    $region58: #{siamese_multitask_forward.1} parent=1 // pred_check
      _
    $region59: #{siamese_multitask_forward.1} parent=1 // pred_check_branch
      %717 = sbr.rel (0) target = $region61
    $region60: #{siamese_multitask_forward.1} parent=1 // pred_region
      _
    $region61: #{siamese_multitask_forward.1} parent=1 // pred_fallthru
      _
    // Predicated region
    $region62: #{siamese_multitask_forward.1} parent=1 // pred_check
      _
    $region63: #{siamese_multitask_forward.1} parent=1 // pred_check_branch
      %719 = sbr.rel (0) target = $region65
    $region64: #{siamese_multitask_forward.1} parent=1 // pred_region
      _
    $region65: #{siamese_multitask_forward.1} parent=1 // pred_fallthru
      _
    // Predicated region
    $region66: #{siamese_multitask_forward.1} parent=1 // pred_check
      _
    $region67: #{siamese_multitask_forward.1} parent=1 // pred_check_branch
      %721 = sbr.rel (0) target = $region69
    $region68: #{siamese_multitask_forward.1} parent=1 // pred_region
      _
    $region69: #{siamese_multitask_forward.1} parent=1 // pred_fallthru
      _
    // Predicated region
    $region70: #{siamese_multitask_forward.1} parent=1 // pred_check
      _
    $region71: #{siamese_multitask_forward.1} parent=1 // pred_check_branch
      %723 = sbr.rel (0) target = $region73
    $region72: #{siamese_multitask_forward.1} parent=1 // pred_region
      _
    $region73: #{siamese_multitask_forward.1} parent=1 // pred_fallthru
      _
    %724 = vsyncpa [#allocation3], 1
    %725 = vsyncpa [#allocation5], 1
    %726 = vsyncpa [#allocation8], 1
    %727 = vsyncpa [#allocation11], 1

</llo_original>
